<compile_context>
chip_gen: v7x
topology: tpu7x:2x2x1
jax: 0.10.0
libtpu: 0.0.40
codegen_flags: <defaults>
</compile_context>

<pallas_src>
import numpy as np
import jax
import jax.numpy as jnp
from jax.experimental import pallas as pl
from jax.experimental.pallas import tpu as pltpu


def _round_up(v, m):
    return ((v + m - 1) // m) * m


def _compute_freq_bands(N_freqs, max_freq, log_sampling):
    if N_freqs <= 0:
        return np.zeros((0,), dtype=np.float64)
    if log_sampling:
        return 2.0 ** np.linspace(0.0, float(max_freq), int(N_freqs))
    return np.linspace(2.0 ** 0.0, 2.0 ** float(max_freq), int(N_freqs))


def _build_row_table(D, freq_bands, periodic_fns, include_input):
    """Per-output-row metadata for the dense (out_dim, tile) slab.

    Row order matches the PyTorch module exactly:
      [x (if include_input)] ++ [fn(x * f) for f in freqs for fn in periodic_fns]
    Every piece is D rows wide and row r always reads input coordinate r % D.
    """
    # Group periodic_fns by identity so (sin, cos) -> two dense fn slabs.
    distinct_fns, fn_ids = [], []
    for fn in periodic_fns:
        for idx, g in enumerate(distinct_fns):
            if g is fn:
                fn_ids.append(idx)
                break
        else:
            distinct_fns.append(fn)
            fn_ids.append(len(distinct_fns) - 1)

    rows = []  # (src_coord, scale, fn_id); fn_id == -1 -> identity row
    if include_input or len(periodic_fns) == 0:
        for d in range(D):
            rows.append((d, 1.0, -1))
    for f in freq_bands:
        for fid in fn_ids:
            for d in range(D):
                rows.append((d, float(f), fid))

    out_dim = len(rows)
    n_fns = len(distinct_fns)
    meta = np.zeros((max(out_dim, 1), D + n_fns), dtype=np.float32)
    for r, (d, scale, fid) in enumerate(rows):
        meta[r, d] = scale
        if fid >= 0:
            meta[r, D + fid] = 1.0
    return meta, distinct_fns, out_dim


def _make_kernel(D, out_dim, distinct_fns):
    def kernel(meta_ref, x_ref, o_ref):
        x = x_ref[...].astype(jnp.float32)     # (D, tile); lanes = points
        meta = meta_ref[...]                   # (out_dim, D + n_fns), f32
        tile = x.shape[1]

        # S[r, :] = x[r % D, :] * scale_r, built densely: sublane-broadcast of
        # each input row over all out_dim rows, weighted by a per-row column
        # of the metadata table (identity rows have scale 1.0).
        S = None
        for d in range(D):
            term = (jnp.broadcast_to(x[d:d + 1, :], (out_dim, tile))
                    * meta[:, d:d + 1])
            S = term if S is None else S + term

        # Evaluate each periodic fn once over the whole dense slab (EUP work
        # at full lane+sublane density) and select it into its rows; identity
        # rows keep S == x.
        E = S
        for j, fn in enumerate(distinct_fns):
            E = jnp.where(meta[:, D + j:D + j + 1] > 0.5, fn(S), E)

        o_ref[...] = E.astype(o_ref.dtype)     # single lane-dense block store

    return kernel


def embedder_pallas(x, *, N_freqs, max_freq, periodic_fns=(jnp.sin, jnp.cos),
                    log_sampling=True, include_input=True, out_dtype=None,
                    tile_n=None, feature_major_output=False):
    """x: (..., D).  Returns (..., out_dim) with the module's row ordering."""
    orig_shape = x.shape
    D = orig_shape[-1]
    x2 = x.reshape(-1, D)
    N = x2.shape[0]
    out_dtype = x.dtype if out_dtype is None else out_dtype

    freq_bands = (_compute_freq_bands(N_freqs, max_freq, log_sampling)
                  if len(periodic_fns) != 0 else np.zeros((0,)))
    meta_np, distinct_fns, out_dim = _build_row_table(
        D, freq_bands, periodic_fns, include_input)
    if out_dim == 0:
        raise ValueError("Embedder configuration produces an empty output.")
    n_fns = len(distinct_fns)

    # ---- tile selection: large, VMEM-budgeted, megacore-balanced ----------
    in_item = jnp.dtype(x.dtype).itemsize
    out_item = jnp.dtype(out_dtype).itemsize
    out_rows_pad = _round_up(out_dim, 8)
    if tile_n is None:
        budget = 24 * 1024 * 1024          # headroom under the 32 MiB scoped limit
        per_point = (2 * out_rows_pad * out_item   # double-buffered output block
                     + 2 * 8 * in_item             # double-buffered input block
                     + 4 * out_rows_pad * 4)       # f32 slab temporaries
        tile = max(512, min(16384, budget // per_point))
    else:
        tile = max(128, int(tile_n))
    # v7x megacore balance: keep >= ~4 grid steps so "parallel" splits across TCs.
    tile = min(tile, max(128, _round_up(-(-N // 4), 128)))
    tile = max(128, (tile // 128) * 128)

    grid_n = pl.cdiv(N, tile)
    n_pad = grid_n * tile

    # Input-side layout plumbing only (the small, un-expanded tensor).
    xt = jnp.transpose(x2)                  # (D, N)
    if n_pad != N:
        xt = jnp.pad(xt, ((0, 0), (0, n_pad - N)))
    meta = jnp.asarray(meta_np)

    kernel = _make_kernel(D, out_dim, distinct_fns)

    cost = pl.CostEstimate(
        flops=int(n_pad) * out_dim * (2 * D + n_fns),
        transcendentals=int(n_pad) * out_dim * n_fns,
        bytes_accessed=int(n_pad) * (D * in_item + out_dim * out_item)
                       + int(meta_np.size) * 4,
    )

    out_t = pl.pallas_call(
        kernel,
        out_shape=jax.ShapeDtypeStruct((out_dim, n_pad), out_dtype),
        grid=(grid_n,),
        in_specs=[pl.BlockSpec((out_dim, meta_np.shape[1]), lambda i: (0, 0)),
                  pl.BlockSpec((D, tile), lambda i: (0, i))],
        out_specs=pl.BlockSpec((out_dim, tile), lambda i: (0, i)),
        compiler_params=pltpu.CompilerParams(
            dimension_semantics=("parallel",),
            vmem_limit_bytes=32 * 1024 * 1024),
        cost_estimate=cost,
    )(meta, xt)

    if feature_major_output:
        # Kernel-native (out_dim, N): contract over out_dim in the consumer's
        # first matmul (fold the permutation into W1) -- no extra HBM pass.
        return out_t[:, :N]

    # TODO(synk): this transpose re-streams the expanded tensor through HBM;
    # use feature_major_output=True and fuse into the consumer to remove it.
    out = jnp.transpose(out_t)[:N]
    return out.reshape(*orig_shape[:-1], out_dim)


def embedder_ref(x, *, N_freqs, max_freq, periodic_fns=(jnp.sin, jnp.cos),
                 log_sampling=True, include_input=True):
    """Pure-JAX reference mirroring the PyTorch forward."""
    outs = []
    if include_input or len(periodic_fns) == 0:
        outs.append(x)
    if len(periodic_fns) != 0:
        for f in _compute_freq_bands(N_freqs, max_freq, log_sampling):
            for p_fn in periodic_fns:
                outs.append(p_fn(x * float(f)))
    return jnp.concatenate(outs, axis=-1)


if __name__ == "__main__":
    key = jax.random.PRNGKey(0)
    k1, k2, k3 = jax.random.split(key, 3)

    # (a) batched input, total N=200 (not a multiple of 128), N_freqs=4.
    x_a = jax.random.normal(k1, (2, 100, 3), dtype=jnp.float32)
    ref_a = embedder_ref(x_a, N_freqs=4, max_freq=3.0)
    out_a = jax.block_until_ready(embedder_pallas(x_a, N_freqs=4, max_freq=3.0))
    assert out_a.shape == (2, 100, 3 * (1 + 2 * 4)), out_a.shape
    np.testing.assert_allclose(np.asarray(out_a), np.asarray(ref_a),
                               rtol=2e-5, atol=2e-5)

    # (b) NeRF-standard N_freqs=10 / max_freq=9 (top band 512): validates that
    #     the direct dense sin/cos path has no octave-compounding drift.
    x_b = jax.random.uniform(k2, (333, 3), dtype=jnp.float32,
                             minval=-1.0, maxval=1.0)
    ref_b = embedder_ref(x_b, N_freqs=10, max_freq=9.0)
    out_b = jax.block_until_ready(embedder_pallas(x_b, N_freqs=10, max_freq=9.0))
    assert out_b.shape == (333, 3 * (1 + 2 * 10)), out_b.shape
    np.testing.assert_allclose(np.asarray(out_b), np.asarray(ref_b),
                               rtol=2e-4, atol=2e-4)

    # (c) include_input=False branch.
    x_c = jax.random.normal(k3, (200, 3), dtype=jnp.float32)
    ref_c = embedder_ref(x_c, N_freqs=4, max_freq=3.0, include_input=False)
    out_c = jax.block_until_ready(
        embedder_pallas(x_c, N_freqs=4, max_freq=3.0, include_input=False))
    assert out_c.shape == (200, 3 * (2 * 4)), out_c.shape
    np.testing.assert_allclose(np.asarray(out_c), np.asarray(ref_c),
                               rtol=2e-5, atol=2e-5)

    print("KERNEL_OK")
</pallas_src>

<mosaic_0001>
module attributes {stable_mosaic.version = 11 : i64} {
  func.func @kernel(%arg0: i32, %arg1: memref<27x5xf32, #tpu.memory_space<vmem>>, %arg2: memref<3x128xf32, #tpu.memory_space<vmem>>, %arg3: memref<27x128xf32, #tpu.memory_space<vmem>>) attributes {dimension_semantics = [#tpu.dimension_semantics<parallel>], iteration_bounds = array<i64: 2>, scalar_prefetch = 0 : i64, scratch_operands = 0 : i64, tpu.core_type = #tpu.core_type<tc>, window_params = [{pipeline_mode = #tpu.pipeline_mode<synchronous>, transform_indices = @transform_0, window_bounds = array<i64: 27, 5>}, {transform_indices = @transform_1, window_bounds = array<i64: 3, 128>}, {transform_indices = @transform_2, window_bounds = array<i64: 27, 128>}]} {
    %c0 = arith.constant 0 : index
    %c0_0 = arith.constant 0 : index
    %0 = vector.load %arg2[%c0, %c0_0] : memref<3x128xf32, #tpu.memory_space<vmem>>, vector<3x128xf32>
    %c0_1 = arith.constant 0 : index
    %c0_2 = arith.constant 0 : index
    %1 = vector.load %arg1[%c0_1, %c0_2] : memref<27x5xf32, #tpu.memory_space<vmem>>, vector<27x5xf32>
    %2 = vector.extract_strided_slice %0 {offsets = [0, 0], sizes = [1, 128], strides = [1, 1]} : vector<3x128xf32> to vector<1x128xf32>
    %3 = vector.shape_cast %2 : vector<1x128xf32> to vector<1x128xf32>
    %4 = vector.broadcast %3 : vector<1x128xf32> to vector<27x128xf32>
    %5 = vector.extract_strided_slice %1 {offsets = [0, 0], sizes = [27, 1], strides = [1, 1]} : vector<27x5xf32> to vector<27x1xf32>
    %6 = vector.broadcast %5 : vector<27x1xf32> to vector<27x128xf32>
    %7 = arith.mulf %4, %6 : vector<27x128xf32>
    %8 = vector.extract_strided_slice %0 {offsets = [1, 0], sizes = [1, 128], strides = [1, 1]} : vector<3x128xf32> to vector<1x128xf32>
    %9 = vector.shape_cast %8 : vector<1x128xf32> to vector<1x128xf32>
    %10 = vector.broadcast %9 : vector<1x128xf32> to vector<27x128xf32>
    %11 = vector.extract_strided_slice %1 {offsets = [0, 1], sizes = [27, 1], strides = [1, 1]} : vector<27x5xf32> to vector<27x1xf32>
    %12 = vector.broadcast %11 : vector<27x1xf32> to vector<27x128xf32>
    %13 = arith.mulf %10, %12 : vector<27x128xf32>
    %14 = arith.addf %7, %13 : vector<27x128xf32>
    %15 = vector.extract_strided_slice %0 {offsets = [2, 0], sizes = [1, 128], strides = [1, 1]} : vector<3x128xf32> to vector<1x128xf32>
    %16 = vector.shape_cast %15 : vector<1x128xf32> to vector<1x128xf32>
    %17 = vector.broadcast %16 : vector<1x128xf32> to vector<27x128xf32>
    %18 = vector.extract_strided_slice %1 {offsets = [0, 2], sizes = [27, 1], strides = [1, 1]} : vector<27x5xf32> to vector<27x1xf32>
    %19 = vector.broadcast %18 : vector<27x1xf32> to vector<27x128xf32>
    %20 = arith.mulf %17, %19 : vector<27x128xf32>
    %21 = arith.addf %14, %20 : vector<27x128xf32>
    %22 = vector.extract_strided_slice %1 {offsets = [0, 3], sizes = [27, 1], strides = [1, 1]} : vector<27x5xf32> to vector<27x1xf32>
    %cst = arith.constant 5.000000e-01 : f32
    %23 = vector.broadcast %cst : f32 to vector<27x1xf32>
    %24 = arith.cmpf ogt, %22, %23 : vector<27x1xf32>
    %25 = math.sin %21 : vector<27x128xf32>
    %26 = vector.shape_cast %24 : vector<27x1xi1> to vector<27x1xi1>
    %27 = vector.broadcast %26 : vector<27x1xi1> to vector<27x128xi1>
    %28 = arith.select %27, %25, %21 : vector<27x128xi1>, vector<27x128xf32>
    %29 = vector.extract_strided_slice %1 {offsets = [0, 4], sizes = [27, 1], strides = [1, 1]} : vector<27x5xf32> to vector<27x1xf32>
    %cst_3 = arith.constant 5.000000e-01 : f32
    %30 = vector.broadcast %cst_3 : f32 to vector<27x1xf32>
    %31 = arith.cmpf ogt, %29, %30 : vector<27x1xf32>
    %32 = math.cos %21 : vector<27x128xf32>
    %33 = vector.shape_cast %31 : vector<27x1xi1> to vector<27x1xi1>
    %34 = vector.broadcast %33 : vector<27x1xi1> to vector<27x128xi1>
    %35 = arith.select %34, %32, %28 : vector<27x128xi1>, vector<27x128xf32>
    %c0_4 = arith.constant 0 : index
    %c0_5 = arith.constant 0 : index
    %36 = vector.load %arg3[%c0_4, %c0_5] : memref<27x128xf32, #tpu.memory_space<vmem>>, vector<27x128xf32>
    tpu.vector_store %arg3[%c0_4, %c0_5], %35 {strides = array<i32>} : memref<27x128xf32, #tpu.memory_space<vmem>>, vector<27x128xf32>,
    return
  }
  func.func @transform_0(%arg0: i32) -> (i32, i32) {
    %c0_i32 = arith.constant 0 : i32
    %c0_i32_0 = arith.constant 0 : i32
    %c0_i32_1 = arith.constant 0 : i32
    return %c0_i32, %c0_i32_0 : i32, i32
  }
  func.func @transform_1(%arg0: i32) -> (i32, i32) {
    %c0_i32 = arith.constant 0 : i32
    %c0_i32_0 = arith.constant 0 : i32
    return %c0_i32, %arg0 : i32, i32
  }
  func.func @transform_2(%arg0: i32) -> (i32, i32) {
    %c0_i32 = arith.constant 0 : i32
    %c0_i32_0 = arith.constant 0 : i32
    return %c0_i32, %arg0 : i32, i32
  }
}

</mosaic_0001>

<llo_original>
// kernel: tpu_custom_call.1
$region0: #{tpu_custom_call.1}
  #allocation0 [shape = 'u32[]', space=smem, size = 0x4, offset = 0x4, fixed_abs, tag = 'smem constant byte address 0x4 - core index']
  #allocation1 [shape = 'u32[144,128]{1,0:T(1,128)}', space=vmem, size = 0x12000, scoped, tag = 'internal scratch']
  %s0 = inlined_call_operand.vmem [shape: f32[27,5], index: 0, kind: input, shape index: {}]
  %s1 = inlined_call_operand.vmem [shape: f32[3,256], index: 1, kind: input, shape index: {}]
  %s2 = inlined_call_operand.hbm [shape: f32[27,256], index: 2, kind: output, shape index: {}]
  %s3 = sld [smem:[#allocation0]]
  $region41: #{tpu_custom_call.1} parent=0
    _
  %s5 = ssub.s32 1, %s3
  %s6 = scalar_select 0, %s5, %s3
  $region1: #{tpu_custom_call.1} parent=0
    #allocation2 [shape = 'u8[32768]{0}', space=vmem, size = 0x8000, scoped, tag = 'output window, operand 0']
    #allocation3 [shape = 's32[2]{0}', space=sflag, size = 0x8, scoped, tag = 'scoped memory for tpu_custom_call.1']
    %7 = vsyncpa [#allocation3], 0
    %s8 = scalar_lea.sflag [#allocation3], 1
    %9 = vsyncpa %s8, 0
    loop: start=0, step=1, limit=4
    $region2: #{tpu_custom_call.1} parent=1 // loop_pre_header
      _
    $region3: #{tpu_custom_call.1} parent=1 // loop_header
      %s11 = sphi 0, %s15
      %p12 = scmp.ge.s32.totalorder %s11, 4
      %s19 = sphi 0, %s19
      %s21 = sphi 0, %s19
      %s22 = sphi 0, %s21
      %s36 = sphi 0, %s22
      %s42 = sphi 0, %s44
      %s45 = sphi 0, %s42
      %s46 = sphi 0, %s45
      %s62 = sphi 0, %s46
      %s68 = sphi 0, %s70
      %s71 = sphi 0, %s68
      %s72 = sphi 0, %s71
      %s88 = sphi 0, %s72
    $region4: #{tpu_custom_call.1} parent=1 // loop_header_branch
      %14 = sbr.rel (%p12) target = $region8
    $region5: #{tpu_custom_call.1} parent=1 // loop_body
      %s16 = ssub.s32 %s11, 1
      %s17 = ssub.s32 %s11, 2
      %s18 = sadd.s32 %s11, 1
      %s20 = sadd.s32 %s19, 1
      %p23 = scmp.eq.s32.totalorder %s11, 1
      %p24 = scmp.ne.s32.totalorder %s19, %s21
      %p25 = scmp.eq.s32.totalorder %s11, 0
      %p26 = por %p24, %p25
      %p27 = scmp.ne.s32.totalorder %s19, %s21
      %p28 = scmp.eq.s32.totalorder %s16, 1
      %p29 = por %p27, %p28
      %p30 = scmp.ne.s32.totalorder %s21, %s22
      %p31 = scmp.eq.s32.totalorder %s16, 0
      %p32 = por %p30, %p31
      %p33 = scmp.ne.s32.totalorder %s21, %s22
      %p34 = scmp.eq.s32.totalorder %s17, 1
      %p35 = por %p33, %p34
      %p37 = scmp.ne.s32.totalorder %s22, %s36
      %p38 = scmp.eq.s32.totalorder %s17, 0
      %p39 = por %p37, %p38
      %s40 = ssub.s32 %s11, %s18
      %p41 = scmp.eq.s32.totalorder %s40, 0
      %s43 = sadd.s32 %s42, 1
      %s44 = scalar_select %p41, %s42, %s43
      %p47 = pneg %p41
      %p48 = scmp.eq.s32.totalorder %s11, 1
      %p49 = por %p47, %p48
      %p50 = scmp.ne.s32.totalorder %s42, %s45
      %p51 = scmp.eq.s32.totalorder %s11, 0
      %p52 = por %p50, %p51
      %p53 = scmp.ne.s32.totalorder %s42, %s45
      %p54 = scmp.eq.s32.totalorder %s16, 1
      %p55 = por %p53, %p54
      %p56 = scmp.ne.s32.totalorder %s45, %s46
      %p57 = scmp.eq.s32.totalorder %s16, 0
      %p58 = por %p56, %p57
      %p59 = scmp.ne.s32.totalorder %s45, %s46
      %p60 = scmp.eq.s32.totalorder %s17, 1
      %p61 = por %p59, %p60
      %p63 = scmp.ne.s32.totalorder %s46, %s62
      %p64 = scmp.eq.s32.totalorder %s17, 0
      %p65 = por %p63, %p64
      %s66 = ssub.s32 %s11, %s18
      %p67 = scmp.eq.s32.totalorder %s66, 0
      %s69 = sadd.s32 %s68, 1
      %s70 = scalar_select %p67, %s68, %s69
      %p73 = pneg %p67
      %p74 = scmp.eq.s32.totalorder %s11, 1
      %p75 = por %p73, %p74
      %p76 = scmp.ne.s32.totalorder %s68, %s71
      %p77 = scmp.eq.s32.totalorder %s11, 0
      %p78 = por %p76, %p77
      %p79 = scmp.ne.s32.totalorder %s68, %s71
      %p80 = scmp.eq.s32.totalorder %s16, 1
      %p81 = por %p79, %p80
      %p82 = scmp.ne.s32.totalorder %s71, %s72
      %p83 = scmp.eq.s32.totalorder %s16, 0
      %p84 = por %p82, %p83
      %p85 = scmp.ne.s32.totalorder %s71, %s72
      %p86 = scmp.eq.s32.totalorder %s17, 1
      %p87 = por %p85, %p86
      %p89 = scmp.ne.s32.totalorder %s72, %s88
      %p90 = scmp.eq.s32.totalorder %s17, 0
      %p91 = por %p89, %p90
      %p92 = scmp.le.s32.totalorder 1, %s11
      %p93 = scmp.lt.s32.totalorder %s11, 3
      %p94 = pnand %p92, %p93
      %p95 = pneg %p94
      // Predicated region
      $region9: #{tpu_custom_call.1} parent=5 // pred_check
        _
      $region10: #{tpu_custom_call.1} parent=5 // pred_check_branch
        %97 = sbr.rel (%p94) target = $region12
      $region11: #{tpu_custom_call.1} parent=5 // pred_region
        %s98 = ssub.s32 %s11, 1
        // Predicated region
        $region13: #{tpu_custom_call.1} parent=11 // pred_check
          %p99 = pneg %p32
        $region14: #{tpu_custom_call.1} parent=11 // pred_check_branch
          %101 = sbr.rel (%p99) target = $region16
        $region15: #{tpu_custom_call.1} parent=11 // pred_region
          _
        $region16: #{tpu_custom_call.1} parent=11 // pred_fallthru
          _
      $region12: #{tpu_custom_call.1} parent=5 // pred_fallthru
        _
      %p102 = scmp.lt.s32.totalorder %s11, 2
      // Predicated region
      $region17: #{tpu_custom_call.1} parent=5 // pred_check
        %p103 = pneg %p102
      $region18: #{tpu_custom_call.1} parent=5 // pred_check_branch
        %105 = sbr.rel (%p103) target = $region20
      $region19: #{tpu_custom_call.1} parent=5 // pred_region
        // Predicated region
        $region21: #{tpu_custom_call.1} parent=19 // pred_check
          %p106 = pneg %p52
        $region22: #{tpu_custom_call.1} parent=19 // pred_check_branch
          %108 = sbr.rel (%p106) target = $region24
        $region23: #{tpu_custom_call.1} parent=19 // pred_region
          %p109 = scmp.lt.s32.totalorder %s11, 1
          %s110 = scalar_select %p109, %s11, 1
          %s111 = smul.addr %s110, 4
          %s112 = scalar_lea.vmem %s1, %s111
        $region24: #{tpu_custom_call.1} parent=19 // pred_fallthru
          _
      $region20: #{tpu_custom_call.1} parent=5 // pred_fallthru
        _
      %p113 = scmp.le.s32.totalorder 1, %s11
      %p114 = scmp.lt.s32.totalorder %s11, 3
      %p115 = pnand %p113, %p114
      %p116 = pneg %p115
      // Predicated region
      $region25: #{tpu_custom_call.1} parent=5 // pred_check
        _
      $region26: #{tpu_custom_call.1} parent=5 // pred_check_branch
        %118 = sbr.rel (%p115) target = $region28
      $region27: #{tpu_custom_call.1} parent=5 // pred_region
        %s119 = ssub.s32 %s11, 1
        %p120 = pneg %p32
        %p121 = pneg %p29
        %p122 = scmp.lt.s32.totalorder %s16, 1
        %s123 = scalar_select %p122, %s16, 1
        %s124 = smul.addr %s123, 4
        %s125 = scalar_lea.vmem %s1, %s124
        %p126 = pneg %p58
        %p127 = pneg %p55
        %p128 = pneg %p84
        %p129 = pneg %p81
        %s130 = sand.u32 %s71, 1
        %s131 = scalar_lea.sflag [#allocation3], %s130
        %s132 = sand.u32 %s71, 1
        %s133 = smul.addr %s132, 32
        %s134 = scalar_lea.vmem [#allocation2], %s133
        %p135 = scmp.lt.s32.totalorder %s16, 1
        %s136 = scalar_select %p135, %s16, 1
        %s137 = smul.addr %s136, 4
        %s138 = scalar_lea.vmem %s1, %s137
        %v139 = vld [vmem:[%s138] sm:$0x7]
        %v140 = vld [vmem:[%s0] sm:$0xff]
        %v141 = vld [vmem:[%s0 + $0x8] sm:$0xff]
        %v142 = vld [vmem:[%s0 + $0x10] sm:$0xff]
        %v143 = vld [vmem:[%s0 + $0x18] sm:$0x7]
        %v144 = vlaneseq
        %v145 = vshrl.u32 %v144, 7
        %v146 = vsub.s32 0, %v145
        %v147 = vrot.slane %v139, %v146
        %149 = vset.pattern.permute.xlu0 0
        %150 = vperm.xlu0 %149, %v140
        %v151 = vpop.permute.xlu0 %150
        %154 = vset.pattern.permute.xlu0 0
        %155 = vperm.xlu0 %154, %v141
        %v156 = vpop.permute.xlu0 %155
        %159 = vset.pattern.permute.xlu0 0
        %160 = vperm.xlu0 %159, %v142
        %v161 = vpop.permute.xlu0 %160
        %164 = vset.pattern.permute.xlu0 0
        %165 = vperm.xlu0 %164, %v143
        %v166 = vpop.permute.xlu0 %165
        %v168 = vmul.f32 %v147, %v151
        %v169 = vmul.f32 %v147, %v156
        %v170 = vmul.f32 %v147, %v161
        %v171 = vmul.f32 %v147, %v166
        %v172 = vlaneseq
        %v173 = vshrl.u32 %v172, 7
        %v174 = vsub.s32 1, %v173
        %v175 = vrot.slane %v139, %v174
        %176 = vset.pattern.permute.xlu0 1
        %177 = vperm.xlu0 %176, %v140
        %v178 = vpop.permute.xlu0 %177
        %180 = vset.pattern.permute.xlu0 1
        %181 = vperm.xlu0 %180, %v141
        %v182 = vpop.permute.xlu0 %181
        %184 = vset.pattern.permute.xlu0 1
        %185 = vperm.xlu0 %184, %v142
        %v186 = vpop.permute.xlu0 %185
        %188 = vset.pattern.permute.xlu0 1
        %189 = vperm.xlu0 %188, %v143
        %v190 = vpop.permute.xlu0 %189
        %v192 = vmul.f32 %v175, %v178
        %v193 = vmul.f32 %v175, %v182
        %v194 = vmul.f32 %v175, %v186
        %v195 = vmul.f32 %v175, %v190
        %v196 = vadd.f32 %v168, %v192
        %v197 = vadd.f32 %v169, %v193
        %v198 = vadd.f32 %v170, %v194
        %v199 = vadd.f32 %v171, %v195
        %v200 = vlaneseq
        %v201 = vshrl.u32 %v200, 7
        %v202 = vsub.s32 2, %v201
        %v203 = vrot.slane %v139, %v202
        %204 = vset.pattern.permute.xlu0 2
        %205 = vperm.xlu0 %204, %v140
        %v206 = vpop.permute.xlu0 %205
        %208 = vset.pattern.permute.xlu0 2
        %209 = vperm.xlu0 %208, %v141
        %v210 = vpop.permute.xlu0 %209
        %212 = vset.pattern.permute.xlu0 2
        %213 = vperm.xlu0 %212, %v142
        %v214 = vpop.permute.xlu0 %213
        %216 = vset.pattern.permute.xlu0 2
        %217 = vperm.xlu0 %216, %v143
        %v218 = vpop.permute.xlu0 %217
        %v220 = vmul.f32 %v203, %v206
        %v221 = vmul.f32 %v203, %v210
        %v222 = vmul.f32 %v203, %v214
        %v223 = vmul.f32 %v203, %v218
        %v224 = vadd.f32 %v196, %v220
        %v225 = vadd.f32 %v197, %v221
        %v226 = vadd.f32 %v198, %v222
        %v227 = vadd.f32 %v199, %v223
        %vm228 = vcmp.gt.f32.partialorder %v140, 0.5
        %vm229 = vcmp.gt.f32.partialorder %v141, 0.5
        %vm230 = vcmp.gt.f32.partialorder %v142, 0.5
        %vm231 = vcmp.gt.f32.partialorder %v143, 0.5
        %v232 = vand.u32 2147483647, %v224
        %vm233 = vcmp.le.f32.partialorder %v232, 0.7853982
        %vm234 = vcmp.lt.s32.totalorder %v224, 0
        %v235 = vand.u32 %v224, 2139095040
        %v236 = vshrl.u32 %v235, 23
        %v237 = vsub.s32 %v236, 127
        %v238 = vand.u32 2147483647, %v224
        %v239 = vand.u32 %v238, 8388607
        %v240 = vor.u32 %v239, 8388608
        %v241 = vsub.s32 0, %v240
        %v242 = vadd.s32 %v237, 1
        %vm243 = vcmp.gt.s32.totalorder %v242, 0
        %v244 = vsel %vm243, %v242, 0
        %v245 = vshrl.u32 %v244, 5
        %v246 = vand.u32 %v244, 31
        %v247 = vsub.s32 32, %v246
        %v248 = vshrl.u32 683565275, %v247
        %v249 = vshll.u32 683565275, %v246
        %v250 = vshrl.u32 2475754826, %v247
        %v251 = vor.u32 %v249, %v250
        %v252 = vshll.u32 2475754826, %v246
        %v253 = vshrl.u32 2131351028, %v247
        %v254 = vor.u32 %v252, %v253
        %v255 = vshll.u32 2131351028, %v246
        %v256 = vshrl.u32 2102212464, %v247
        %v257 = vor.u32 %v255, %v256
        %v258 = vshll.u32 2102212464, %v246
        %v259 = vshrl.u32 920167782, %v247
        %v260 = vor.u32 %v258, %v259
        %v261 = vshll.u32 920167782, %v246
        %v262 = vshrl.u32 1326507024, %v247
        %v263 = vor.u32 %v261, %v262
        %vm264 = vcmp.lt.s32.totalorder %v245, 1
        %vm265 = vcmp.lt.s32.totalorder %v245, 2
        %vm266 = vcmp.lt.s32.totalorder %v245, 3
        %vm267 = vcmp.lt.s32.totalorder %v245, 4
        %v268 = vsel %vm264, %v248, %v251
        %v269 = vsel %vm267, %v257, 2102212464
        %v270 = vsel %vm266, %v254, %v269
        %v271 = vsel %vm265, %v268, %v270
        %v272 = vsel %vm264, %v251, %v254
        %v273 = vsel %vm267, %v260, 920167782
        %v274 = vsel %vm266, %v257, %v273
        %v275 = vsel %vm265, %v272, %v274
        %v276 = vsel %vm264, %v254, %v257
        %v277 = vsel %vm267, %v263, 1326507024
        %v278 = vsel %vm266, %v260, %v277
        %v279 = vsel %vm265, %v276, %v278
        %v280 = vshll.u32 %v240, 8
        %v281 = vmul.u32.u64.compose %v280, %v279
        %v282 = vextract.low.u32 %v281
        %v283 = vextract.high.u32 %v281
        %v284 = vmul.u32.u64.compose %v280, %v275
        %v285 = vextract.low.u32 %v284
        %v286 = vextract.high.u32 %v284
        %v287 = vmul.u32 %v280, %v271
        %v288 = vadd.s32 %v283, %v285
        %vm289 = vc.u32 %v283, %v285
        %v290 = vadd.s32 %v286, 1
        %v291 = vsel %vm289, %v290, %v286
        %v292 = vadd.s32 %v287, %v291
        %v293 = vadd.s32 %v292, 536870912
        %v294 = vshrl.u32 %v293, 30
        %v295 = vshll.u32 %v294, 30
        %v296 = vsub.s32 %v292, %v295
        %vm297 = vcmp.lt.s32.totalorder %v296, 0
        %v298 = vsub.s32 0, %v296
        %v299 = vsel %vm297, %v298, %v296
        %v300 = vclz %v299
        %v301 = vsub.s32 %v300, 2
        %vm302 = vcmp.gt.s32.totalorder 0, %v301
        %v303 = vsel %vm302, 0, %v301
        %v304 = vsub.s32 32, %v303
        %v305 = vshll.u32 %v296, %v303
        %v306 = vshrl.u32 %v288, %v304
        %v307 = vor.u32 %v305, %v306
        %v308 = vsub.s32 4294967266, %v303
        %v309 = vadd.s32 %v308, 127
        %v310 = vshll.u32 %v309, 23
        %v311 = vor.u32 4788187, %v310
        %v312 = vand.u32 2147483647, %v311
        %v314 = vcvt.s32.f32 %v307
        %v315 = vmul.f32 %v314, %v312
        %v316 = vxor.u32 %v315, 2147483648
        %v317 = vsel %vm234, %v316, %v315
        %v318 = vsub.s32 4, %v294
        %v319 = vsel %vm234, %v318, %v294
        %v320 = vsel %vm233, %v224, %v317
        %v321 = vsel %vm233, 0, %v319
        %v322 = vcosq.f32.pop %v320
        %v323 = vsinq.f32.pop %v320
        %vm324 = vweird.f32 %v224
        %v325 = vadd.s32 %v321, 3
        %v326 = vand.u32 %v325, 3
        %vm327 = vcmp.lt.s32.totalorder %v326, 2
        %vm328 = vcmp.eq.s32.totalorder %v326, 0
        %v329 = vxor.u32 %v323, 2147483648
        %v330 = vsel %vm328, %v322, %v329
        %vm331 = vcmp.eq.s32.totalorder %v326, 2
        %v332 = vxor.u32 %v322, 2147483648
        %v333 = vsel %vm331, %v332, %v323
        %v334 = vsel %vm327, %v330, %v333
        %v335 = vsel %vm324, nan, %v334
        %v336 = vand.u32 2147483647, %v225
        %vm337 = vcmp.le.f32.partialorder %v336, 0.7853982
        %vm338 = vcmp.lt.s32.totalorder %v225, 0
        %v339 = vand.u32 %v225, 2139095040
        %v340 = vshrl.u32 %v339, 23
        %v341 = vsub.s32 %v340, 127
        %v342 = vand.u32 2147483647, %v225
        %v343 = vand.u32 %v342, 8388607
        %v344 = vor.u32 %v343, 8388608
        %v345 = vsub.s32 0, %v344
        %v346 = vadd.s32 %v341, 1
        %vm347 = vcmp.gt.s32.totalorder %v346, 0
        %v348 = vsel %vm347, %v346, 0
        %v349 = vshrl.u32 %v348, 5
        %v350 = vand.u32 %v348, 31
        %v351 = vsub.s32 32, %v350
        %v352 = vshrl.u32 683565275, %v351
        %v353 = vshll.u32 683565275, %v350
        %v354 = vshrl.u32 2475754826, %v351
        %v355 = vor.u32 %v353, %v354
        %v356 = vshll.u32 2475754826, %v350
        %v357 = vshrl.u32 2131351028, %v351
        %v358 = vor.u32 %v356, %v357
        %v359 = vshll.u32 2131351028, %v350
        %v360 = vshrl.u32 2102212464, %v351
        %v361 = vor.u32 %v359, %v360
        %v362 = vshll.u32 2102212464, %v350
        %v363 = vshrl.u32 920167782, %v351
        %v364 = vor.u32 %v362, %v363
        %v365 = vshll.u32 920167782, %v350
        %v366 = vshrl.u32 1326507024, %v351
        %v367 = vor.u32 %v365, %v366
        %vm368 = vcmp.lt.s32.totalorder %v349, 1
        %vm369 = vcmp.lt.s32.totalorder %v349, 2
        %vm370 = vcmp.lt.s32.totalorder %v349, 3
        %vm371 = vcmp.lt.s32.totalorder %v349, 4
        %v372 = vsel %vm368, %v352, %v355
        %v373 = vsel %vm371, %v361, 2102212464
        %v374 = vsel %vm370, %v358, %v373
        %v375 = vsel %vm369, %v372, %v374
        %v376 = vsel %vm368, %v355, %v358
        %v377 = vsel %vm371, %v364, 920167782
        %v378 = vsel %vm370, %v361, %v377
        %v379 = vsel %vm369, %v376, %v378
        %v380 = vsel %vm368, %v358, %v361
        %v381 = vsel %vm371, %v367, 1326507024
        %v382 = vsel %vm370, %v364, %v381
        %v383 = vsel %vm369, %v380, %v382
        %v384 = vshll.u32 %v344, 8
        %v385 = vmul.u32.u64.compose %v384, %v383
        %v386 = vextract.low.u32 %v385
        %v387 = vextract.high.u32 %v385
        %v388 = vmul.u32.u64.compose %v384, %v379
        %v389 = vextract.low.u32 %v388
        %v390 = vextract.high.u32 %v388
        %v391 = vmul.u32 %v384, %v375
        %v392 = vadd.s32 %v387, %v389
        %vm393 = vc.u32 %v387, %v389
        %v394 = vadd.s32 %v390, 1
        %v395 = vsel %vm393, %v394, %v390
        %v396 = vadd.s32 %v391, %v395
        %v397 = vadd.s32 %v396, 536870912
        %v398 = vshrl.u32 %v397, 30
        %v399 = vshll.u32 %v398, 30
        %v400 = vsub.s32 %v396, %v399
        %vm401 = vcmp.lt.s32.totalorder %v400, 0
        %v402 = vsub.s32 0, %v400
        %v403 = vsel %vm401, %v402, %v400
        %v404 = vclz %v403
        %v405 = vsub.s32 %v404, 2
        %vm406 = vcmp.gt.s32.totalorder 0, %v405
        %v407 = vsel %vm406, 0, %v405
        %v408 = vsub.s32 32, %v407
        %v409 = vshll.u32 %v400, %v407
        %v410 = vshrl.u32 %v392, %v408
        %v411 = vor.u32 %v409, %v410
        %v412 = vsub.s32 4294967266, %v407
        %v413 = vadd.s32 %v412, 127
        %v414 = vshll.u32 %v413, 23
        %v415 = vor.u32 4788187, %v414
        %v416 = vand.u32 2147483647, %v415
        %v418 = vcvt.s32.f32 %v411
        %v419 = vmul.f32 %v418, %v416
        %v420 = vxor.u32 %v419, 2147483648
        %v421 = vsel %vm338, %v420, %v419
        %v422 = vsub.s32 4, %v398
        %v423 = vsel %vm338, %v422, %v398
        %v424 = vsel %vm337, %v225, %v421
        %v425 = vsel %vm337, 0, %v423
        %v426 = vcosq.f32.pop %v424
        %v427 = vsinq.f32.pop %v424
        %vm428 = vweird.f32 %v225
        %v429 = vadd.s32 %v425, 3
        %v430 = vand.u32 %v429, 3
        %vm431 = vcmp.lt.s32.totalorder %v430, 2
        %vm432 = vcmp.eq.s32.totalorder %v430, 0
        %v433 = vxor.u32 %v427, 2147483648
        %v434 = vsel %vm432, %v426, %v433
        %vm435 = vcmp.eq.s32.totalorder %v430, 2
        %v436 = vxor.u32 %v426, 2147483648
        %v437 = vsel %vm435, %v436, %v427
        %v438 = vsel %vm431, %v434, %v437
        %v439 = vsel %vm428, nan, %v438
        %v440 = vand.u32 2147483647, %v226
        %vm441 = vcmp.le.f32.partialorder %v440, 0.7853982
        %vm442 = vcmp.lt.s32.totalorder %v226, 0
        %v443 = vand.u32 %v226, 2139095040
        %v444 = vshrl.u32 %v443, 23
        %v445 = vsub.s32 %v444, 127
        %v446 = vand.u32 2147483647, %v226
        %v447 = vand.u32 %v446, 8388607
        %v448 = vor.u32 %v447, 8388608
        %v449 = vsub.s32 0, %v448
        %v450 = vadd.s32 %v445, 1
        %vm451 = vcmp.gt.s32.totalorder %v450, 0
        %v452 = vsel %vm451, %v450, 0
        %v453 = vshrl.u32 %v452, 5
        %v454 = vand.u32 %v452, 31
        %v455 = vsub.s32 32, %v454
        %v456 = vshrl.u32 683565275, %v455
        %v457 = vshll.u32 683565275, %v454
        %v458 = vshrl.u32 2475754826, %v455
        %v459 = vor.u32 %v457, %v458
        %v460 = vshll.u32 2475754826, %v454
        %v461 = vshrl.u32 2131351028, %v455
        %v462 = vor.u32 %v460, %v461
        %v463 = vshll.u32 2131351028, %v454
        %v464 = vshrl.u32 2102212464, %v455
        %v465 = vor.u32 %v463, %v464
        %v466 = vshll.u32 2102212464, %v454
        %v467 = vshrl.u32 920167782, %v455
        %v468 = vor.u32 %v466, %v467
        %v469 = vshll.u32 920167782, %v454
        %v470 = vshrl.u32 1326507024, %v455
        %v471 = vor.u32 %v469, %v470
        %vm472 = vcmp.lt.s32.totalorder %v453, 1
        %vm473 = vcmp.lt.s32.totalorder %v453, 2
        %vm474 = vcmp.lt.s32.totalorder %v453, 3
        %vm475 = vcmp.lt.s32.totalorder %v453, 4
        %v476 = vsel %vm472, %v456, %v459
        %v477 = vsel %vm475, %v465, 2102212464
        %v478 = vsel %vm474, %v462, %v477
        %v479 = vsel %vm473, %v476, %v478
        %v480 = vsel %vm472, %v459, %v462
        %v481 = vsel %vm475, %v468, 920167782
        %v482 = vsel %vm474, %v465, %v481
        %v483 = vsel %vm473, %v480, %v482
        %v484 = vsel %vm472, %v462, %v465
        %v485 = vsel %vm475, %v471, 1326507024
        %v486 = vsel %vm474, %v468, %v485
        %v487 = vsel %vm473, %v484, %v486
        %v488 = vshll.u32 %v448, 8
        %v489 = vmul.u32.u64.compose %v488, %v487
        %v490 = vextract.low.u32 %v489
        %v491 = vextract.high.u32 %v489
        %v492 = vmul.u32.u64.compose %v488, %v483
        %v493 = vextract.low.u32 %v492
        %v494 = vextract.high.u32 %v492
        %v495 = vmul.u32 %v488, %v479
        %v496 = vadd.s32 %v491, %v493
        %vm497 = vc.u32 %v491, %v493
        %v498 = vadd.s32 %v494, 1
        %v499 = vsel %vm497, %v498, %v494
        %v500 = vadd.s32 %v495, %v499
        %v501 = vadd.s32 %v500, 536870912
        %v502 = vshrl.u32 %v501, 30
        %v503 = vshll.u32 %v502, 30
        %v504 = vsub.s32 %v500, %v503
        %vm505 = vcmp.lt.s32.totalorder %v504, 0
        %v506 = vsub.s32 0, %v504
        %v507 = vsel %vm505, %v506, %v504
        %v508 = vclz %v507
        %v509 = vsub.s32 %v508, 2
        %vm510 = vcmp.gt.s32.totalorder 0, %v509
        %v511 = vsel %vm510, 0, %v509
        %v512 = vsub.s32 32, %v511
        %v513 = vshll.u32 %v504, %v511
        %v514 = vshrl.u32 %v496, %v512
        %v515 = vor.u32 %v513, %v514
        %v516 = vsub.s32 4294967266, %v511
        %v517 = vadd.s32 %v516, 127
        %v518 = vshll.u32 %v517, 23
        %v519 = vor.u32 4788187, %v518
        %v520 = vand.u32 2147483647, %v519
        %v522 = vcvt.s32.f32 %v515
        %v523 = vmul.f32 %v522, %v520
        %v524 = vxor.u32 %v523, 2147483648
        %v525 = vsel %vm442, %v524, %v523
        %v526 = vsub.s32 4, %v502
        %v527 = vsel %vm442, %v526, %v502
        %v528 = vsel %vm441, %v226, %v525
        %v529 = vsel %vm441, 0, %v527
        %v530 = vcosq.f32.pop %v528
        %v531 = vsinq.f32.pop %v528
        %vm532 = vweird.f32 %v226
        %v533 = vadd.s32 %v529, 3
        %v534 = vand.u32 %v533, 3
        %vm535 = vcmp.lt.s32.totalorder %v534, 2
        %vm536 = vcmp.eq.s32.totalorder %v534, 0
        %v537 = vxor.u32 %v531, 2147483648
        %v538 = vsel %vm536, %v530, %v537
        %vm539 = vcmp.eq.s32.totalorder %v534, 2
        %v540 = vxor.u32 %v530, 2147483648
        %v541 = vsel %vm539, %v540, %v531
        %v542 = vsel %vm535, %v538, %v541
        %v543 = vsel %vm532, nan, %v542
        %v544 = vand.u32 2147483647, %v227
        %vm545 = vcmp.le.f32.partialorder %v544, 0.7853982
        %vm546 = vcmp.lt.s32.totalorder %v227, 0
        %v547 = vand.u32 %v227, 2139095040
        %v548 = vshrl.u32 %v547, 23
        %v549 = vsub.s32 %v548, 127
        %v550 = vand.u32 2147483647, %v227
        %v551 = vand.u32 %v550, 8388607
        %v552 = vor.u32 %v551, 8388608
        %v553 = vsub.s32 0, %v552
        %v554 = vadd.s32 %v549, 1
        %vm555 = vcmp.gt.s32.totalorder %v554, 0
        %v556 = vsel %vm555, %v554, 0
        %v557 = vshrl.u32 %v556, 5
        %v558 = vand.u32 %v556, 31
        %v559 = vsub.s32 32, %v558
        %v560 = vshrl.u32 683565275, %v559
        %v561 = vshll.u32 683565275, %v558
        %v562 = vshrl.u32 2475754826, %v559
        %v563 = vor.u32 %v561, %v562
        %v564 = vshll.u32 2475754826, %v558
        %v565 = vshrl.u32 2131351028, %v559
        %v566 = vor.u32 %v564, %v565
        %v567 = vshll.u32 2131351028, %v558
        %v568 = vshrl.u32 2102212464, %v559
        %v569 = vor.u32 %v567, %v568
        %v570 = vshll.u32 2102212464, %v558
        %v571 = vshrl.u32 920167782, %v559
        %v572 = vor.u32 %v570, %v571
        %v573 = vshll.u32 920167782, %v558
        %v574 = vshrl.u32 1326507024, %v559
        %v575 = vor.u32 %v573, %v574
        %vm576 = vcmp.lt.s32.totalorder %v557, 1
        %vm577 = vcmp.lt.s32.totalorder %v557, 2
        %vm578 = vcmp.lt.s32.totalorder %v557, 3
        %vm579 = vcmp.lt.s32.totalorder %v557, 4
        %v580 = vsel %vm576, %v560, %v563
        %v581 = vsel %vm579, %v569, 2102212464
        %v582 = vsel %vm578, %v566, %v581
        %v583 = vsel %vm577, %v580, %v582
        %v584 = vsel %vm576, %v563, %v566
        %v585 = vsel %vm579, %v572, 920167782
        %v586 = vsel %vm578, %v569, %v585
        %v587 = vsel %vm577, %v584, %v586
        %v588 = vsel %vm576, %v566, %v569
        %v589 = vsel %vm579, %v575, 1326507024
        %v590 = vsel %vm578, %v572, %v589
        %v591 = vsel %vm577, %v588, %v590
        %v592 = vshll.u32 %v552, 8
        %v593 = vmul.u32.u64.compose %v592, %v591
        %v594 = vextract.low.u32 %v593
        %v595 = vextract.high.u32 %v593
        %v596 = vmul.u32.u64.compose %v592, %v587
        %v597 = vextract.low.u32 %v596
        %v598 = vextract.high.u32 %v596
        %v599 = vmul.u32 %v592, %v583
        %v600 = vadd.s32 %v595, %v597
        %vm601 = vc.u32 %v595, %v597
        %v602 = vadd.s32 %v598, 1
        %v603 = vsel %vm601, %v602, %v598
        %v604 = vadd.s32 %v599, %v603
        %v605 = vadd.s32 %v604, 536870912
        %v606 = vshrl.u32 %v605, 30
        %v607 = vshll.u32 %v606, 30
        %v608 = vsub.s32 %v604, %v607
        %vm609 = vcmp.lt.s32.totalorder %v608, 0
        %v610 = vsub.s32 0, %v608
        %v611 = vsel %vm609, %v610, %v608
        %v612 = vclz %v611
        %v613 = vsub.s32 %v612, 2
        %vm614 = vcmp.gt.s32.totalorder 0, %v613
        %v615 = vsel %vm614, 0, %v613
        %v616 = vsub.s32 32, %v615
        %v617 = vshll.u32 %v608, %v615
        %v618 = vshrl.u32 %v600, %v616
        %v619 = vor.u32 %v617, %v618
        %v620 = vsub.s32 4294967266, %v615
        %v621 = vadd.s32 %v620, 127
        %v622 = vshll.u32 %v621, 23
        %v623 = vor.u32 4788187, %v622
        %v624 = vand.u32 2147483647, %v623
        %v626 = vcvt.s32.f32 %v619
        %v627 = vmul.f32 %v626, %v624
        %v628 = vxor.u32 %v627, 2147483648
        %v629 = vsel %vm546, %v628, %v627
        %v630 = vsub.s32 4, %v606
        %v631 = vsel %vm546, %v630, %v606
        %v632 = vsel %vm545, %v227, %v629
        %v633 = vsel %vm545, 0, %v631
        %v634 = vcosq.f32.pop %v632
        %v635 = vsinq.f32.pop %v632
        %vm636 = vweird.f32 %v227
        %v637 = vadd.s32 %v633, 3
        %v638 = vand.u32 %v637, 3
        %vm639 = vcmp.lt.s32.totalorder %v638, 2
        %vm640 = vcmp.eq.s32.totalorder %v638, 0
        %v641 = vxor.u32 %v635, 2147483648
        %v642 = vsel %vm640, %v634, %v641
        %vm643 = vcmp.eq.s32.totalorder %v638, 2
        %v644 = vxor.u32 %v634, 2147483648
        %v645 = vsel %vm643, %v644, %v635
        %v646 = vsel %vm639, %v642, %v645
        %v647 = vsel %vm636, nan, %v646
        %v648 = vsel %vm228, 1, 0
        %v649 = vsel %vm229, 1, 0
        %v650 = vsel %vm230, 1, 0
        %v651 = vsel %vm231, 1, 0
        %652 = vset.pattern.permute.xlu0 3
        %653 = vperm.xlu0 %652, %v648
        %v654 = vpop.permute.xlu0 %653
        %655 = vset.pattern.permute.xlu0 3
        %656 = vperm.xlu0 %655, %v649
        %v657 = vpop.permute.xlu0 %656
        %658 = vset.pattern.permute.xlu0 3
        %659 = vperm.xlu0 %658, %v650
        %v660 = vpop.permute.xlu0 %659
        %661 = vset.pattern.permute.xlu0 3
        %662 = vperm.xlu0 %661, %v651
        %v663 = vpop.permute.xlu0 %662
        %vm664 = vcmp.eq.s32.totalorder %v654, 1
        %vm665 = vcmp.eq.s32.totalorder %v657, 1
        %vm666 = vcmp.eq.s32.totalorder %v660, 1
        %vm667 = vcmp.eq.s32.totalorder %v663, 1
        %v668 = vsel %vm664, %v335, %v224
        %v669 = vsel %vm665, %v439, %v225
        %v670 = vsel %vm666, %v543, %v226
        %v671 = vsel %vm667, %v647, %v227
        %v672 = vand.u32 2147483647, %v224
        %vm673 = vcmp.le.f32.partialorder %v672, 0.7853982
        %vm674 = vcmp.lt.s32.totalorder %v224, 0
        %v675 = vand.u32 %v224, 2139095040
        %v676 = vshrl.u32 %v675, 23
        %v677 = vsub.s32 %v676, 127
        %v678 = vand.u32 2147483647, %v224
        %v679 = vand.u32 %v678, 8388607
        %v680 = vor.u32 %v679, 8388608
        %v681 = vsub.s32 0, %v680
        %v682 = vadd.s32 %v677, 1
        %vm683 = vcmp.gt.s32.totalorder %v682, 0
        %v684 = vsel %vm683, %v682, 0
        %v685 = vshrl.u32 %v684, 5
        %v686 = vand.u32 %v684, 31
        %v687 = vsub.s32 32, %v686
        %v688 = vshrl.u32 683565275, %v687
        %v689 = vshll.u32 683565275, %v686
        %v690 = vshrl.u32 2475754826, %v687
        %v691 = vor.u32 %v689, %v690
        %v692 = vshll.u32 2475754826, %v686
        %v693 = vshrl.u32 2131351028, %v687
        %v694 = vor.u32 %v692, %v693
        %v695 = vshll.u32 2131351028, %v686
        %v696 = vshrl.u32 2102212464, %v687
        %v697 = vor.u32 %v695, %v696
        %v698 = vshll.u32 2102212464, %v686
        %v699 = vshrl.u32 920167782, %v687
        %v700 = vor.u32 %v698, %v699
        %v701 = vshll.u32 920167782, %v686
        %v702 = vshrl.u32 1326507024, %v687
        %v703 = vor.u32 %v701, %v702
        %vm704 = vcmp.lt.s32.totalorder %v685, 1
        %vm705 = vcmp.lt.s32.totalorder %v685, 2
        %vm706 = vcmp.lt.s32.totalorder %v685, 3
        %vm707 = vcmp.lt.s32.totalorder %v685, 4
        %v708 = vsel %vm704, %v688, %v691
        %v709 = vsel %vm707, %v697, 2102212464
        %v710 = vsel %vm706, %v694, %v709
        %v711 = vsel %vm705, %v708, %v710
        %v712 = vsel %vm704, %v691, %v694
        %v713 = vsel %vm707, %v700, 920167782
        %v714 = vsel %vm706, %v697, %v713
        %v715 = vsel %vm705, %v712, %v714
        %v716 = vsel %vm704, %v694, %v697
        %v717 = vsel %vm707, %v703, 1326507024
        %v718 = vsel %vm706, %v700, %v717
        %v719 = vsel %vm705, %v716, %v718
        %v720 = vshll.u32 %v680, 8
        %v721 = vmul.u32.u64.compose %v720, %v719
        %v722 = vextract.low.u32 %v721
        %v723 = vextract.high.u32 %v721
        %v724 = vmul.u32.u64.compose %v720, %v715
        %v725 = vextract.low.u32 %v724
        %v726 = vextract.high.u32 %v724
        %v727 = vmul.u32 %v720, %v711
        %v728 = vadd.s32 %v723, %v725
        %vm729 = vc.u32 %v723, %v725
        %v730 = vadd.s32 %v726, 1
        %v731 = vsel %vm729, %v730, %v726
        %v732 = vadd.s32 %v727, %v731
        %v733 = vadd.s32 %v732, 536870912
        %v734 = vshrl.u32 %v733, 30
        %v735 = vshll.u32 %v734, 30
        %v736 = vsub.s32 %v732, %v735
        %vm737 = vcmp.lt.s32.totalorder %v736, 0
        %v738 = vsub.s32 0, %v736
        %v739 = vsel %vm737, %v738, %v736
        %v740 = vclz %v739
        %v741 = vsub.s32 %v740, 2
        %vm742 = vcmp.gt.s32.totalorder 0, %v741
        %v743 = vsel %vm742, 0, %v741
        %v744 = vsub.s32 32, %v743
        %v745 = vshll.u32 %v736, %v743
        %v746 = vshrl.u32 %v728, %v744
        %v747 = vor.u32 %v745, %v746
        %v748 = vsub.s32 4294967266, %v743
        %v749 = vadd.s32 %v748, 127
        %v750 = vshll.u32 %v749, 23
        %v751 = vor.u32 4788187, %v750
        %v752 = vand.u32 2147483647, %v751
        %v754 = vcvt.s32.f32 %v747
        %v755 = vmul.f32 %v754, %v752
        %v756 = vxor.u32 %v755, 2147483648
        %v757 = vsel %vm674, %v756, %v755
        %v758 = vsub.s32 4, %v734
        %v759 = vsel %vm674, %v758, %v734
        %v760 = vsel %vm673, %v224, %v757
        %v761 = vsel %vm673, 0, %v759
        %v762 = vcosq.f32.pop %v760
        %v763 = vsinq.f32.pop %v760
        %vm764 = vweird.f32 %v224
        %v765 = vand.u32 %v761, 3
        %vm766 = vcmp.lt.s32.totalorder %v765, 2
        %vm767 = vcmp.eq.s32.totalorder %v765, 0
        %v768 = vxor.u32 %v763, 2147483648
        %v769 = vsel %vm767, %v762, %v768
        %vm770 = vcmp.eq.s32.totalorder %v765, 2
        %v771 = vxor.u32 %v762, 2147483648
        %v772 = vsel %vm770, %v771, %v763
        %v773 = vsel %vm766, %v769, %v772
        %v774 = vsel %vm764, nan, %v773
        %v775 = vand.u32 2147483647, %v225
        %vm776 = vcmp.le.f32.partialorder %v775, 0.7853982
        %vm777 = vcmp.lt.s32.totalorder %v225, 0
        %v778 = vand.u32 %v225, 2139095040
        %v779 = vshrl.u32 %v778, 23
        %v780 = vsub.s32 %v779, 127
        %v781 = vand.u32 2147483647, %v225
        %v782 = vand.u32 %v781, 8388607
        %v783 = vor.u32 %v782, 8388608
        %v784 = vsub.s32 0, %v783
        %v785 = vadd.s32 %v780, 1
        %vm786 = vcmp.gt.s32.totalorder %v785, 0
        %v787 = vsel %vm786, %v785, 0
        %v788 = vshrl.u32 %v787, 5
        %v789 = vand.u32 %v787, 31
        %v790 = vsub.s32 32, %v789
        %v791 = vshrl.u32 683565275, %v790
        %v792 = vshll.u32 683565275, %v789
        %v793 = vshrl.u32 2475754826, %v790
        %v794 = vor.u32 %v792, %v793
        %v795 = vshll.u32 2475754826, %v789
        %v796 = vshrl.u32 2131351028, %v790
        %v797 = vor.u32 %v795, %v796
        %v798 = vshll.u32 2131351028, %v789
        %v799 = vshrl.u32 2102212464, %v790
        %v800 = vor.u32 %v798, %v799
        %v801 = vshll.u32 2102212464, %v789
        %v802 = vshrl.u32 920167782, %v790
        %v803 = vor.u32 %v801, %v802
        %v804 = vshll.u32 920167782, %v789
        %v805 = vshrl.u32 1326507024, %v790
        %v806 = vor.u32 %v804, %v805
        %vm807 = vcmp.lt.s32.totalorder %v788, 1
        %vm808 = vcmp.lt.s32.totalorder %v788, 2
        %vm809 = vcmp.lt.s32.totalorder %v788, 3
        %vm810 = vcmp.lt.s32.totalorder %v788, 4
        %v811 = vsel %vm807, %v791, %v794
        %v812 = vsel %vm810, %v800, 2102212464
        %v813 = vsel %vm809, %v797, %v812
        %v814 = vsel %vm808, %v811, %v813
        %v815 = vsel %vm807, %v794, %v797
        %v816 = vsel %vm810, %v803, 920167782
        %v817 = vsel %vm809, %v800, %v816
        %v818 = vsel %vm808, %v815, %v817
        %v819 = vsel %vm807, %v797, %v800
        %v820 = vsel %vm810, %v806, 1326507024
        %v821 = vsel %vm809, %v803, %v820
        %v822 = vsel %vm808, %v819, %v821
        %v823 = vshll.u32 %v783, 8
        %v824 = vmul.u32.u64.compose %v823, %v822
        %v825 = vextract.low.u32 %v824
        %v826 = vextract.high.u32 %v824
        %v827 = vmul.u32.u64.compose %v823, %v818
        %v828 = vextract.low.u32 %v827
        %v829 = vextract.high.u32 %v827
        %v830 = vmul.u32 %v823, %v814
        %v831 = vadd.s32 %v826, %v828
        %vm832 = vc.u32 %v826, %v828
        %v833 = vadd.s32 %v829, 1
        %v834 = vsel %vm832, %v833, %v829
        %v835 = vadd.s32 %v830, %v834
        %v836 = vadd.s32 %v835, 536870912
        %v837 = vshrl.u32 %v836, 30
        %v838 = vshll.u32 %v837, 30
        %v839 = vsub.s32 %v835, %v838
        %vm840 = vcmp.lt.s32.totalorder %v839, 0
        %v841 = vsub.s32 0, %v839
        %v842 = vsel %vm840, %v841, %v839
        %v843 = vclz %v842
        %v844 = vsub.s32 %v843, 2
        %vm845 = vcmp.gt.s32.totalorder 0, %v844
        %v846 = vsel %vm845, 0, %v844
        %v847 = vsub.s32 32, %v846
        %v848 = vshll.u32 %v839, %v846
        %v849 = vshrl.u32 %v831, %v847
        %v850 = vor.u32 %v848, %v849
        %v851 = vsub.s32 4294967266, %v846
        %v852 = vadd.s32 %v851, 127
        %v853 = vshll.u32 %v852, 23
        %v854 = vor.u32 4788187, %v853
        %v855 = vand.u32 2147483647, %v854
        %v857 = vcvt.s32.f32 %v850
        %v858 = vmul.f32 %v857, %v855
        %v859 = vxor.u32 %v858, 2147483648
        %v860 = vsel %vm777, %v859, %v858
        %v861 = vsub.s32 4, %v837
        %v862 = vsel %vm777, %v861, %v837
        %v863 = vsel %vm776, %v225, %v860
        %v864 = vsel %vm776, 0, %v862
        %v865 = vcosq.f32.pop %v863
        %v866 = vsinq.f32.pop %v863
        %vm867 = vweird.f32 %v225
        %v868 = vand.u32 %v864, 3
        %vm869 = vcmp.lt.s32.totalorder %v868, 2
        %vm870 = vcmp.eq.s32.totalorder %v868, 0
        %v871 = vxor.u32 %v866, 2147483648
        %v872 = vsel %vm870, %v865, %v871
        %vm873 = vcmp.eq.s32.totalorder %v868, 2
        %v874 = vxor.u32 %v865, 2147483648
        %v875 = vsel %vm873, %v874, %v866
        %v876 = vsel %vm869, %v872, %v875
        %v877 = vsel %vm867, nan, %v876
        %v878 = vand.u32 2147483647, %v226
        %vm879 = vcmp.le.f32.partialorder %v878, 0.7853982
        %vm880 = vcmp.lt.s32.totalorder %v226, 0
        %v881 = vand.u32 %v226, 2139095040
        %v882 = vshrl.u32 %v881, 23
        %v883 = vsub.s32 %v882, 127
        %v884 = vand.u32 2147483647, %v226
        %v885 = vand.u32 %v884, 8388607
        %v886 = vor.u32 %v885, 8388608
        %v887 = vsub.s32 0, %v886
        %v888 = vadd.s32 %v883, 1
        %vm889 = vcmp.gt.s32.totalorder %v888, 0
        %v890 = vsel %vm889, %v888, 0
        %v891 = vshrl.u32 %v890, 5
        %v892 = vand.u32 %v890, 31
        %v893 = vsub.s32 32, %v892
        %v894 = vshrl.u32 683565275, %v893
        %v895 = vshll.u32 683565275, %v892
        %v896 = vshrl.u32 2475754826, %v893
        %v897 = vor.u32 %v895, %v896
        %v898 = vshll.u32 2475754826, %v892
        %v899 = vshrl.u32 2131351028, %v893
        %v900 = vor.u32 %v898, %v899
        %v901 = vshll.u32 2131351028, %v892
        %v902 = vshrl.u32 2102212464, %v893
        %v903 = vor.u32 %v901, %v902
        %v904 = vshll.u32 2102212464, %v892
        %v905 = vshrl.u32 920167782, %v893
        %v906 = vor.u32 %v904, %v905
        %v907 = vshll.u32 920167782, %v892
        %v908 = vshrl.u32 1326507024, %v893
        %v909 = vor.u32 %v907, %v908
        %vm910 = vcmp.lt.s32.totalorder %v891, 1
        %vm911 = vcmp.lt.s32.totalorder %v891, 2
        %vm912 = vcmp.lt.s32.totalorder %v891, 3
        %vm913 = vcmp.lt.s32.totalorder %v891, 4
        %v914 = vsel %vm910, %v894, %v897
        %v915 = vsel %vm913, %v903, 2102212464
        %v916 = vsel %vm912, %v900, %v915
        %v917 = vsel %vm911, %v914, %v916
        %v918 = vsel %vm910, %v897, %v900
        %v919 = vsel %vm913, %v906, 920167782
        %v920 = vsel %vm912, %v903, %v919
        %v921 = vsel %vm911, %v918, %v920
        %v922 = vsel %vm910, %v900, %v903
        %v923 = vsel %vm913, %v909, 1326507024
        %v924 = vsel %vm912, %v906, %v923
        %v925 = vsel %vm911, %v922, %v924
        %v926 = vshll.u32 %v886, 8
        %v927 = vmul.u32.u64.compose %v926, %v925
        %v928 = vextract.low.u32 %v927
        %v929 = vextract.high.u32 %v927
        %v930 = vmul.u32.u64.compose %v926, %v921
        %v931 = vextract.low.u32 %v930
        %v932 = vextract.high.u32 %v930
        %v933 = vmul.u32 %v926, %v917
        %v934 = vadd.s32 %v929, %v931
        %vm935 = vc.u32 %v929, %v931
        %v936 = vadd.s32 %v932, 1
        %v937 = vsel %vm935, %v936, %v932
        %v938 = vadd.s32 %v933, %v937
        %v939 = vadd.s32 %v938, 536870912
        %v940 = vshrl.u32 %v939, 30
        %v941 = vshll.u32 %v940, 30
        %v942 = vsub.s32 %v938, %v941
        %vm943 = vcmp.lt.s32.totalorder %v942, 0
        %v944 = vsub.s32 0, %v942
        %v945 = vsel %vm943, %v944, %v942
        %v946 = vclz %v945
        %v947 = vsub.s32 %v946, 2
        %vm948 = vcmp.gt.s32.totalorder 0, %v947
        %v949 = vsel %vm948, 0, %v947
        %v950 = vsub.s32 32, %v949
        %v951 = vshll.u32 %v942, %v949
        %v952 = vshrl.u32 %v934, %v950
        %v953 = vor.u32 %v951, %v952
        %v954 = vsub.s32 4294967266, %v949
        %v955 = vadd.s32 %v954, 127
        %v956 = vshll.u32 %v955, 23
        %v957 = vor.u32 4788187, %v956
        %v958 = vand.u32 2147483647, %v957
        %v960 = vcvt.s32.f32 %v953
        %v961 = vmul.f32 %v960, %v958
        %v962 = vxor.u32 %v961, 2147483648
        %v963 = vsel %vm880, %v962, %v961
        %v964 = vsub.s32 4, %v940
        %v965 = vsel %vm880, %v964, %v940
        %v966 = vsel %vm879, %v226, %v963
        %v967 = vsel %vm879, 0, %v965
        %v968 = vcosq.f32.pop %v966
        %v969 = vsinq.f32.pop %v966
        %vm970 = vweird.f32 %v226
        %v971 = vand.u32 %v967, 3
        %vm972 = vcmp.lt.s32.totalorder %v971, 2
        %vm973 = vcmp.eq.s32.totalorder %v971, 0
        %v974 = vxor.u32 %v969, 2147483648
        %v975 = vsel %vm973, %v968, %v974
        %vm976 = vcmp.eq.s32.totalorder %v971, 2
        %v977 = vxor.u32 %v968, 2147483648
        %v978 = vsel %vm976, %v977, %v969
        %v979 = vsel %vm972, %v975, %v978
        %v980 = vsel %vm970, nan, %v979
        %v981 = vand.u32 2147483647, %v227
        %vm982 = vcmp.le.f32.partialorder %v981, 0.7853982
        %vm983 = vcmp.lt.s32.totalorder %v227, 0
        %v984 = vand.u32 %v227, 2139095040
        %v985 = vshrl.u32 %v984, 23
        %v986 = vsub.s32 %v985, 127
        %v987 = vand.u32 2147483647, %v227
        %v988 = vand.u32 %v987, 8388607
        %v989 = vor.u32 %v988, 8388608
        %v990 = vsub.s32 0, %v989
        %v991 = vadd.s32 %v986, 1
        %vm992 = vcmp.gt.s32.totalorder %v991, 0
        %v993 = vsel %vm992, %v991, 0
        %v994 = vshrl.u32 %v993, 5
        %v995 = vand.u32 %v993, 31
        %v996 = vsub.s32 32, %v995
        %v997 = vshrl.u32 683565275, %v996
        %v998 = vshll.u32 683565275, %v995
        %v999 = vshrl.u32 2475754826, %v996
        %v1000 = vor.u32 %v998, %v999
        %v1001 = vshll.u32 2475754826, %v995
        %v1002 = vshrl.u32 2131351028, %v996
        %v1003 = vor.u32 %v1001, %v1002
        %v1004 = vshll.u32 2131351028, %v995
        %v1005 = vshrl.u32 2102212464, %v996
        %v1006 = vor.u32 %v1004, %v1005
        %v1007 = vshll.u32 2102212464, %v995
        %v1008 = vshrl.u32 920167782, %v996
        %v1009 = vor.u32 %v1007, %v1008
        %v1010 = vshll.u32 920167782, %v995
        %v1011 = vshrl.u32 1326507024, %v996
        %v1012 = vor.u32 %v1010, %v1011
        %vm1013 = vcmp.lt.s32.totalorder %v994, 1
        %vm1014 = vcmp.lt.s32.totalorder %v994, 2
        %vm1015 = vcmp.lt.s32.totalorder %v994, 3
        %vm1016 = vcmp.lt.s32.totalorder %v994, 4
        %v1017 = vsel %vm1013, %v997, %v1000
        %v1018 = vsel %vm1016, %v1006, 2102212464
        %v1019 = vsel %vm1015, %v1003, %v1018
        %v1020 = vsel %vm1014, %v1017, %v1019
        %v1021 = vsel %vm1013, %v1000, %v1003
        %v1022 = vsel %vm1016, %v1009, 920167782
        %v1023 = vsel %vm1015, %v1006, %v1022
        %v1024 = vsel %vm1014, %v1021, %v1023
        %v1025 = vsel %vm1013, %v1003, %v1006
        %v1026 = vsel %vm1016, %v1012, 1326507024
        %v1027 = vsel %vm1015, %v1009, %v1026
        %v1028 = vsel %vm1014, %v1025, %v1027
        %v1029 = vshll.u32 %v989, 8
        %v1030 = vmul.u32.u64.compose %v1029, %v1028
        %v1031 = vextract.low.u32 %v1030
        %v1032 = vextract.high.u32 %v1030
        %v1033 = vmul.u32.u64.compose %v1029, %v1024
        %v1034 = vextract.low.u32 %v1033
        %v1035 = vextract.high.u32 %v1033
        %v1036 = vmul.u32 %v1029, %v1020
        %v1037 = vadd.s32 %v1032, %v1034
        %vm1038 = vc.u32 %v1032, %v1034
        %v1039 = vadd.s32 %v1035, 1
        %v1040 = vsel %vm1038, %v1039, %v1035
        %v1041 = vadd.s32 %v1036, %v1040
        %v1042 = vadd.s32 %v1041, 536870912
        %v1043 = vshrl.u32 %v1042, 30
        %v1044 = vshll.u32 %v1043, 30
        %v1045 = vsub.s32 %v1041, %v1044
        %vm1046 = vcmp.lt.s32.totalorder %v1045, 0
        %v1047 = vsub.s32 0, %v1045
        %v1048 = vsel %vm1046, %v1047, %v1045
        %v1049 = vclz %v1048
        %v1050 = vsub.s32 %v1049, 2
        %vm1051 = vcmp.gt.s32.totalorder 0, %v1050
        %v1052 = vsel %vm1051, 0, %v1050
        %v1053 = vsub.s32 32, %v1052
        %v1054 = vshll.u32 %v1045, %v1052
        %v1055 = vshrl.u32 %v1037, %v1053
        %v1056 = vor.u32 %v1054, %v1055
        %v1057 = vsub.s32 4294967266, %v1052
        %v1058 = vadd.s32 %v1057, 127
        %v1059 = vshll.u32 %v1058, 23
        %v1060 = vor.u32 4788187, %v1059
        %v1061 = vand.u32 2147483647, %v1060
        %v1063 = vcvt.s32.f32 %v1056
        %v1064 = vmul.f32 %v1063, %v1061
        %v1065 = vxor.u32 %v1064, 2147483648
        %v1066 = vsel %vm983, %v1065, %v1064
        %v1067 = vsub.s32 4, %v1043
        %v1068 = vsel %vm983, %v1067, %v1043
        %v1069 = vsel %vm982, %v227, %v1066
        %v1070 = vsel %vm982, 0, %v1068
        %v1071 = vcosq.f32.pop %v1069
        %v1072 = vsinq.f32.pop %v1069
        %vm1073 = vweird.f32 %v227
        %v1074 = vand.u32 %v1070, 3
        %vm1075 = vcmp.lt.s32.totalorder %v1074, 2
        %vm1076 = vcmp.eq.s32.totalorder %v1074, 0
        %v1077 = vxor.u32 %v1072, 2147483648
        %v1078 = vsel %vm1076, %v1071, %v1077
        %vm1079 = vcmp.eq.s32.totalorder %v1074, 2
        %v1080 = vxor.u32 %v1071, 2147483648
        %v1081 = vsel %vm1079, %v1080, %v1072
        %v1082 = vsel %vm1075, %v1078, %v1081
        %v1083 = vsel %vm1073, nan, %v1082
        %1084 = vset.pattern.permute.xlu0 4
        %1085 = vperm.xlu0 %1084, %v648
        %v1086 = vpop.permute.xlu0 %1085
        %1087 = vset.pattern.permute.xlu0 4
        %1088 = vperm.xlu0 %1087, %v649
        %v1089 = vpop.permute.xlu0 %1088
        %1090 = vset.pattern.permute.xlu0 4
        %1091 = vperm.xlu0 %1090, %v650
        %v1092 = vpop.permute.xlu0 %1091
        %1093 = vset.pattern.permute.xlu0 4
        %1094 = vperm.xlu0 %1093, %v651
        %v1095 = vpop.permute.xlu0 %1094
        %vm1096 = vcmp.eq.s32.totalorder %v1086, 1
        %vm1097 = vcmp.eq.s32.totalorder %v1089, 1
        %vm1098 = vcmp.eq.s32.totalorder %v1092, 1
        %vm1099 = vcmp.eq.s32.totalorder %v1095, 1
        %v1100 = vsel %vm1096, %v774, %v668
        %v1101 = vsel %vm1097, %v877, %v669
        %v1102 = vsel %vm1098, %v980, %v670
        %v1103 = vsel %vm1099, %v1083, %v671
        %1104 = vst [vmem:[%s134] sm:$0xff] %v1100
        %1105 = vst [vmem:[%s134 + $0x8] sm:$0xff] %v1101
        %1106 = vst [vmem:[%s134 + $0x10] sm:$0xff] %v1102
        %1107 = vst [vmem:[%s134 + $0x18] sm:$0x7] %v1103
        %s1108 = sand.u32 %s71, 1
        %s1109 = scalar_lea.sflag [#allocation3], %s1108
        %s1110 = sand.u32 %s71, 1
        %s1111 = smul.addr %s1110, 32
        %s1112 = scalar_lea.vmem [#allocation2], %s1111
        // Predicated region
        $region29: #{tpu_custom_call.1} parent=27 // pred_check
          %p1113 = pneg %p81
        $region30: #{tpu_custom_call.1} parent=27 // pred_check_branch
          %1115 = sbr.rel (%p1113) target = $region32
        $region31: #{tpu_custom_call.1} parent=27 // pred_region
          %s1117 = ssub.s32 512, 512
          %1118 = vsyncadd %s1109, %s1117
          %s1119 = smul.addr %s16, 128
          %s1120 = scalar_lea.hbm %s2, %s1119
          %s1121 = sshll.u32 %s1112, 4
          %s1122 = int_to_ptr.vmem [resolvable:$true] %s1121
          %1127 = dma.vmem_to_hbm [thread:$0]  %s1122, 512, %s1120, %s1109, 128, 256, 8
        $region32: #{tpu_custom_call.1} parent=27 // pred_fallthru
          _
      $region28: #{tpu_custom_call.1} parent=5 // pred_fallthru
        _
      %p1128 = scmp.le.s32.totalorder 2, %s11
      // Predicated region
      $region33: #{tpu_custom_call.1} parent=5 // pred_check
        %p1129 = pneg %p1128
      $region34: #{tpu_custom_call.1} parent=5 // pred_check_branch
        %1131 = sbr.rel (%p1129) target = $region36
      $region35: #{tpu_custom_call.1} parent=5 // pred_region
        %s1132 = ssub.s32 %s11, 2
        // Predicated region
        $region37: #{tpu_custom_call.1} parent=35 // pred_check
          %p1133 = pneg %p87
        $region38: #{tpu_custom_call.1} parent=35 // pred_check_branch
          %1135 = sbr.rel (%p1133) target = $region40
        $region39: #{tpu_custom_call.1} parent=35 // pred_region
          %s1136 = sand.u32 %s72, 1
          %s1137 = scalar_lea.sflag [#allocation3], %s1136
          %s1138 = sand.u32 %s72, 1
          %s1139 = smul.addr %s1138, 32
          %s1140 = scalar_lea.vmem [#allocation2], %s1139
          %1141 = dma.done %s1137, 512
        $region40: #{tpu_custom_call.1} parent=35 // pred_fallthru
          _
      $region36: #{tpu_custom_call.1} parent=5 // pred_fallthru
        _
    $region6: #{tpu_custom_call.1} parent=1 // loop_footer
      %s15 = sadd.s32 1, %s11
    $region7: #{tpu_custom_call.1} parent=1 // loop_footer_branch
      %10 = sbr.rel target = $region3
    $region8: #{tpu_custom_call.1} parent=1 // loop_exit
      _
    %1142 = vsyncpa [#allocation3], 1
    %s1143 = scalar_lea.sflag [#allocation3], 1
    %1144 = vsyncpa %s1143, 1

</llo_original>
